<compile_context>
chip_gen: v5e
topology: v5e:2x2
jax: 0.10.0
libtpu: 0.0.40
codegen_flags: <defaults>
</compile_context>

<pallas_src>
import jax
import jax.numpy as jnp
from jax.experimental import pallas as pl
from jax.experimental.pallas import tpu as pltpu

HIDDEN = 128    # hidden width of the DQN MLP
LANE = 128      # lane-dense padding for the n_actions output dimension
TB_CAP = 4096   # VMEM-safe batch-tile cap (output dbl-buffer ~2 MiB bf16)


def dqn_kernel(x_ref, w1_ref, b1_ref, w2_ref, b2_ref, w3_ref, b3_ref, o_ref):
    """One (tb, *) batch tile of the fused 3-layer MLP."""
    x = x_ref[...]                              # (tb, n_obs) f32
    n_obs = x.shape[1]

    # Layer 1 on the VPU: K is tiny (4), so a handful of broadcast-FMAs in
    # f32 beat an MXU matmul that would use <6% of the systolic depth.
    h1 = b1_ref[...]                            # (1, 128), broadcasts up
    for k in range(n_obs):                      # static unroll (n_obs = 4)
        h1 = h1 + x[:, k:k + 1] * w1_ref[k:k + 1, :]
    h1 = jnp.maximum(h1, 0.0)                   # (tb, 128) f32

    # Layer 2 (MXU): bf16 inputs, f32 accumulation; bias + ReLU in f32.
    h2 = jnp.dot(h1.astype(jnp.bfloat16), w2_ref[...],
                 preferred_element_type=jnp.float32)
    h2 = jnp.maximum(h2 + b2_ref[...], 0.0)

    # Layer 3 (no activation), output lane-padded to 128 columns.
    q = jnp.dot(h2.astype(jnp.bfloat16), w3_ref[...],
                preferred_element_type=jnp.float32)
    o_ref[...] = (q + b3_ref[...]).astype(o_ref.dtype)   # lane-dense bf16 store


def prepare_params(w1, b1, w2, b2, w3, b3):
    """One-time parameter prep (amortized across calls):
       - w1/b1 stay f32 (VPU layer-1 path, tiny)
       - w2/w3 bf16 (MXU-native), biases f32 with shape (1, 128)
       - w3/b3 N dim zero-padded n_actions -> 128 for a lane-dense store
    """
    n_actions = w3.shape[1]
    w3p = jnp.zeros((HIDDEN, LANE), jnp.float32).at[:, :n_actions].set(w3)
    b3p = jnp.zeros((1, LANE), jnp.float32).at[:, :n_actions].set(
        b3.reshape(1, n_actions))
    return (
        w1.astype(jnp.float32),                        # (n_obs, 128)
        b1.reshape(1, HIDDEN).astype(jnp.float32),
        w2.astype(jnp.bfloat16),
        b2.reshape(1, HIDDEN).astype(jnp.float32),
        w3p.astype(jnp.bfloat16),
        b3p,
    )


def _num_tensorcores():
    """2 TensorCores per chip on v7x, 1 on v5e/v6e (best-effort detection)."""
    try:
        kind = jax.devices()[0].device_kind.lower()
        if "v7" in kind or "7x" in kind:
            return 2
    except Exception:
        pass
    return 1


def dqn_forward(x, params, n_actions, *, tb=None):
    """Fused DQN forward: x [B, n_obs] f32 -> Q-values [B, n_actions] f32."""
    w1, b1, w2, b2, w3, b3 = params
    B, n_obs = x.shape

    if tb is None:
        # One block per TensorCore (so v7x shards across both cores via the
        # "parallel" axis; v5e/v6e run a single big block), rounded to the
        # sublane multiple and capped for VMEM on large replay batches.
        ntc = _num_tensorcores()
        tb = -(-B // ntc)            # ceil(B / num cores)
        tb = -(-tb // 8) * 8         # sublane (8) multiple
        tb = min(max(tb, 8), TB_CAP)

    nb = pl.cdiv(B, tb)
    b_pad = nb * tb
    # Only pad the batch dim when needed; x stays f32 and is cast in-kernel.
    x_p = x if b_pad == B else jnp.pad(x, ((0, b_pad - B), (0, 0)))

    # Weights/biases: full-array blocks with constant index maps -> VMEM
    # residents shared by every batch block (not re-DMA'd per grid step).
    resident = lambda a: pl.BlockSpec(a.shape, lambda i: (0, 0))

    out = pl.pallas_call(
        dqn_kernel,
        # bf16 lane-dense output halves the dominant HBM writeback.
        out_shape=jax.ShapeDtypeStruct((b_pad, LANE), jnp.bfloat16),
        grid=(nb,),
        in_specs=[
            pl.BlockSpec((tb, n_obs), lambda i: (i, 0)),   # x: tiled on batch
            resident(w1), resident(b1),
            resident(w2), resident(b2),
            resident(w3), resident(b3),
        ],
        out_specs=pl.BlockSpec((tb, LANE), lambda i: (i, 0)),
        compiler_params=pltpu.CompilerParams(
            dimension_semantics=("parallel",)),
    )(x_p, w1, b1, w2, b2, w3, b3)

    # Slice away batch padding and the zero-padded action lanes BEFORE any
    # downstream argmax so padded columns can never win; upcast to f32.
    return out[:B, :n_actions].astype(jnp.float32)


def init_linear(key, fan_in, fan_out):
    """Deterministic init matching PyTorch nn.Linear default:
    U(-1/sqrt(fan_in), 1/sqrt(fan_in)) for both weight and bias."""
    kw, kb = jax.random.split(key)
    bound = 1.0 / (fan_in ** 0.5)
    w = jax.random.uniform(kw, (fan_in, fan_out), jnp.float32, -bound, bound)
    b = jax.random.uniform(kb, (fan_out,), jnp.float32, -bound, bound)
    return w, b


def reference_forward(x, params, n_actions):
    """Pure-JAX reference mimicking the kernel's numerics (f32 layer 1,
    bf16-quantized inputs to the layer-2/3 MXU matmuls, f32 accumulation)."""
    w1, b1, w2, b2, w3, b3 = [p.astype(jnp.float32) for p in params]
    h1 = jnp.maximum(x @ w1 + b1, 0.0)
    h1q = h1.astype(jnp.bfloat16).astype(jnp.float32)
    h2 = jnp.maximum(h1q @ w2 + b2, 0.0)
    h2q = h2.astype(jnp.bfloat16).astype(jnp.float32)
    return (h2q @ w3 + b3)[:, :n_actions]


if __name__ == "__main__":
    # CartPole-v1: n_observations = 4, n_actions = 2.
    # Batch 256 (replay-buffer-sized): single grid step on v5e/v6e, two
    # "parallel" blocks on v7x.
    n_observations, n_actions, batch = 4, 2, 256

    key = jax.random.PRNGKey(0)
    kx, k1, k2, k3 = jax.random.split(key, 4)

    x = jax.random.normal(kx, (batch, n_observations), jnp.float32)
    w1, b1 = init_linear(k1, n_observations, HIDDEN)
    w2, b2 = init_linear(k2, HIDDEN, HIDDEN)
    w3, b3 = init_linear(k3, HIDDEN, n_actions)

    params = prepare_params(w1, b1, w2, b2, w3, b3)

    out = dqn_forward(x, params, n_actions)
    out = jax.block_until_ready(out)

    ref = reference_forward(x, params, n_actions)
    assert out.shape == (batch, n_actions)
    # bf16 matmul inputs + bf16 output store -> loosened tolerance vs f32 ref.
    assert jnp.allclose(out, ref, atol=2e-2, rtol=2e-2), (
        float(jnp.max(jnp.abs(out - ref))))

    print("KERNEL_OK")
</pallas_src>

<mosaic_0001>
module attributes {stable_mosaic.version = 11 : i64} {
  func.func @dqn_kernel(%arg0: i32, %arg1: memref<256x4xf32, #tpu.memory_space<vmem>>, %arg2: memref<4x128xf32, #tpu.memory_space<vmem>>, %arg3: memref<1x128xf32, #tpu.memory_space<vmem>>, %arg4: memref<128x128xbf16, #tpu.memory_space<vmem>>, %arg5: memref<1x128xf32, #tpu.memory_space<vmem>>, %arg6: memref<128x128xbf16, #tpu.memory_space<vmem>>, %arg7: memref<1x128xf32, #tpu.memory_space<vmem>>, %arg8: memref<256x128xbf16, #tpu.memory_space<vmem>>) attributes {dimension_semantics = [#tpu.dimension_semantics<parallel>], iteration_bounds = array<i64: 1>, scalar_prefetch = 0 : i64, scratch_operands = 0 : i64, tpu.core_type = #tpu.core_type<tc>, window_params = [{transform_indices = @transform_0, window_bounds = array<i64: 256, 4>}, {pipeline_mode = #tpu.pipeline_mode<synchronous>, transform_indices = @transform_1, window_bounds = array<i64: 4, 128>}, {pipeline_mode = #tpu.pipeline_mode<synchronous>, transform_indices = @transform_2, window_bounds = array<i64: 1, 128>}, {pipeline_mode = #tpu.pipeline_mode<synchronous>, transform_indices = @transform_3, window_bounds = array<i64: 128, 128>}, {pipeline_mode = #tpu.pipeline_mode<synchronous>, transform_indices = @transform_4, window_bounds = array<i64: 1, 128>}, {pipeline_mode = #tpu.pipeline_mode<synchronous>, transform_indices = @transform_5, window_bounds = array<i64: 128, 128>}, {pipeline_mode = #tpu.pipeline_mode<synchronous>, transform_indices = @transform_6, window_bounds = array<i64: 1, 128>}, {transform_indices = @transform_7, window_bounds = array<i64: 256, 128>}]} {
    %c0 = arith.constant 0 : index
    %c0_0 = arith.constant 0 : index
    %0 = vector.load %arg1[%c0, %c0_0] : memref<256x4xf32, #tpu.memory_space<vmem>>, vector<256x4xf32>
    %c0_1 = arith.constant 0 : index
    %c0_2 = arith.constant 0 : index
    %1 = vector.load %arg3[%c0_1, %c0_2] : memref<1x128xf32, #tpu.memory_space<vmem>>, vector<1x128xf32>
    %2 = vector.extract_strided_slice %0 {offsets = [0, 0], sizes = [256, 1], strides = [1, 1]} : vector<256x4xf32> to vector<256x1xf32>
    %c0_3 = arith.constant 0 : index
    %c0_4 = arith.constant 0 : index
    %3 = vector.load %arg2[%c0_3, %c0_4] : memref<4x128xf32, #tpu.memory_space<vmem>>, vector<1x128xf32>
    %4 = vector.broadcast %2 : vector<256x1xf32> to vector<256x128xf32>
    %5 = vector.broadcast %3 : vector<1x128xf32> to vector<256x128xf32>
    %6 = arith.mulf %4, %5 : vector<256x128xf32>
    %7 = vector.broadcast %1 : vector<1x128xf32> to vector<256x128xf32>
    %8 = arith.addf %7, %6 : vector<256x128xf32>
    %9 = vector.extract_strided_slice %0 {offsets = [0, 1], sizes = [256, 1], strides = [1, 1]} : vector<256x4xf32> to vector<256x1xf32>
    %c1 = arith.constant 1 : index
    %c0_5 = arith.constant 0 : index
    %10 = vector.load %arg2[%c1, %c0_5] : memref<4x128xf32, #tpu.memory_space<vmem>>, vector<1x128xf32>
    %11 = vector.broadcast %9 : vector<256x1xf32> to vector<256x128xf32>
    %12 = vector.broadcast %10 : vector<1x128xf32> to vector<256x128xf32>
    %13 = arith.mulf %11, %12 : vector<256x128xf32>
    %14 = arith.addf %8, %13 : vector<256x128xf32>
    %15 = vector.extract_strided_slice %0 {offsets = [0, 2], sizes = [256, 1], strides = [1, 1]} : vector<256x4xf32> to vector<256x1xf32>
    %c2 = arith.constant 2 : index
    %c0_6 = arith.constant 0 : index
    %16 = vector.load %arg2[%c2, %c0_6] : memref<4x128xf32, #tpu.memory_space<vmem>>, vector<1x128xf32>
    %17 = vector.broadcast %15 : vector<256x1xf32> to vector<256x128xf32>
    %18 = vector.broadcast %16 : vector<1x128xf32> to vector<256x128xf32>
    %19 = arith.mulf %17, %18 : vector<256x128xf32>
    %20 = arith.addf %14, %19 : vector<256x128xf32>
    %21 = vector.extract_strided_slice %0 {offsets = [0, 3], sizes = [256, 1], strides = [1, 1]} : vector<256x4xf32> to vector<256x1xf32>
    %c3 = arith.constant 3 : index
    %c0_7 = arith.constant 0 : index
    %22 = vector.load %arg2[%c3, %c0_7] : memref<4x128xf32, #tpu.memory_space<vmem>>, vector<1x128xf32>
    %23 = vector.broadcast %21 : vector<256x1xf32> to vector<256x128xf32>
    %24 = vector.broadcast %22 : vector<1x128xf32> to vector<256x128xf32>
    %25 = arith.mulf %23, %24 : vector<256x128xf32>
    %26 = arith.addf %20, %25 : vector<256x128xf32>
    %cst = arith.constant 0.000000e+00 : f32
    %27 = vector.broadcast %cst : f32 to vector<256x128xf32>
    %28 = arith.maximumf %26, %27 : vector<256x128xf32>
    %29 = arith.truncf %28 : vector<256x128xf32> to vector<256x128xbf16>
    %c0_8 = arith.constant 0 : index
    %c0_9 = arith.constant 0 : index
    %30 = vector.load %arg4[%c0_8, %c0_9] : memref<128x128xbf16, #tpu.memory_space<vmem>>, vector<128x128xbf16>
    %cst_10 = arith.constant dense<0.000000e+00> : vector<256x128xf32>
    %31 = tpu.matmul %29, %30, %cst_10 {dimension_numbers = #tpu.dot_dimension_numbers<[1], [0], [0], [1], [0, 0, 1, 1], [], []>} : vector<256x128xbf16>, vector<128x128xbf16>, vector<256x128xf32> -> vector<256x128xf32>
    %c0_11 = arith.constant 0 : index
    %c0_12 = arith.constant 0 : index
    %32 = vector.load %arg5[%c0_11, %c0_12] : memref<1x128xf32, #tpu.memory_space<vmem>>, vector<1x128xf32>
    %33 = vector.broadcast %32 : vector<1x128xf32> to vector<256x128xf32>
    %34 = arith.addf %31, %33 : vector<256x128xf32>
    %cst_13 = arith.constant 0.000000e+00 : f32
    %35 = vector.broadcast %cst_13 : f32 to vector<256x128xf32>
    %36 = arith.maximumf %34, %35 : vector<256x128xf32>
    %37 = arith.truncf %36 : vector<256x128xf32> to vector<256x128xbf16>
    %c0_14 = arith.constant 0 : index
    %c0_15 = arith.constant 0 : index
    %38 = vector.load %arg6[%c0_14, %c0_15] : memref<128x128xbf16, #tpu.memory_space<vmem>>, vector<128x128xbf16>
    %cst_16 = arith.constant dense<0.000000e+00> : vector<256x128xf32>
    %39 = tpu.matmul %37, %38, %cst_16 {dimension_numbers = #tpu.dot_dimension_numbers<[1], [0], [0], [1], [0, 0, 1, 1], [], []>} : vector<256x128xbf16>, vector<128x128xbf16>, vector<256x128xf32> -> vector<256x128xf32>
    %c0_17 = arith.constant 0 : index
    %c0_18 = arith.constant 0 : index
    %40 = vector.load %arg7[%c0_17, %c0_18] : memref<1x128xf32, #tpu.memory_space<vmem>>, vector<1x128xf32>
    %41 = vector.broadcast %40 : vector<1x128xf32> to vector<256x128xf32>
    %42 = arith.addf %39, %41 : vector<256x128xf32>
    %43 = arith.truncf %42 : vector<256x128xf32> to vector<256x128xbf16>
    %c0_19 = arith.constant 0 : index
    %c0_20 = arith.constant 0 : index
    %44 = vector.load %arg8[%c0_19, %c0_20] : memref<256x128xbf16, #tpu.memory_space<vmem>>, vector<256x128xbf16>
    tpu.vector_store %arg8[%c0_19, %c0_20], %43 {strides = array<i32>} : memref<256x128xbf16, #tpu.memory_space<vmem>>, vector<256x128xbf16>,
    return
  }
  func.func @transform_0(%arg0: i32) -> (i32, i32) {
    %c0_i32 = arith.constant 0 : i32
    %c0_i32_0 = arith.constant 0 : i32
    return %arg0, %c0_i32 : i32, i32
  }
  func.func @transform_1(%arg0: i32) -> (i32, i32) {
    %c0_i32 = arith.constant 0 : i32
    %c0_i32_0 = arith.constant 0 : i32
    %c0_i32_1 = arith.constant 0 : i32
    return %c0_i32, %c0_i32_0 : i32, i32
  }
  func.func @transform_2(%arg0: i32) -> (i32, i32) {
    %c0_i32 = arith.constant 0 : i32
    %c0_i32_0 = arith.constant 0 : i32
    %c0_i32_1 = arith.constant 0 : i32
    return %c0_i32, %c0_i32_0 : i32, i32
  }
  func.func @transform_3(%arg0: i32) -> (i32, i32) {
    %c0_i32 = arith.constant 0 : i32
    %c0_i32_0 = arith.constant 0 : i32
    %c0_i32_1 = arith.constant 0 : i32
    return %c0_i32, %c0_i32_0 : i32, i32
  }
  func.func @transform_4(%arg0: i32) -> (i32, i32) {
    %c0_i32 = arith.constant 0 : i32
    %c0_i32_0 = arith.constant 0 : i32
    %c0_i32_1 = arith.constant 0 : i32
    return %c0_i32, %c0_i32_0 : i32, i32
  }
  func.func @transform_5(%arg0: i32) -> (i32, i32) {
    %c0_i32 = arith.constant 0 : i32
    %c0_i32_0 = arith.constant 0 : i32
    %c0_i32_1 = arith.constant 0 : i32
    return %c0_i32, %c0_i32_0 : i32, i32
  }
  func.func @transform_6(%arg0: i32) -> (i32, i32) {
    %c0_i32 = arith.constant 0 : i32
    %c0_i32_0 = arith.constant 0 : i32
    %c0_i32_1 = arith.constant 0 : i32
    return %c0_i32, %c0_i32_0 : i32, i32
  }
  func.func @transform_7(%arg0: i32) -> (i32, i32) {
    %c0_i32 = arith.constant 0 : i32
    %c0_i32_0 = arith.constant 0 : i32
    return %arg0, %c0_i32 : i32, i32
  }
}

</mosaic_0001>

<llo_original>
// kernel: tpu_custom_call.1
$region0: #{tpu_custom_call.1}
  #allocation0 [shape = 'u32[]', space=smem, size = 0x4, offset = 0x4, fixed_abs, tag = 'smem constant byte address 0x4 - core index']
  #allocation1 [shape = 'u32[72,128]{1,0:T(1,128)}', space=vmem, size = 0x9000, scoped, tag = 'internal scratch']
  %s0 = inlined_call_operand.vmem [shape: f32[256,4], index: 0, kind: input, shape index: {}]
  %s1 = inlined_call_operand.vmem [shape: f32[4,128], index: 1, kind: input, shape index: {}]
  %s2 = inlined_call_operand.vmem [shape: f32[1,128], index: 2, kind: input, shape index: {}]
  %s3 = inlined_call_operand.vmem [shape: bf16[128,128], index: 3, kind: input, shape index: {}]
  %s4 = inlined_call_operand.vmem [shape: f32[1,128], index: 4, kind: input, shape index: {}]
  %s5 = inlined_call_operand.vmem [shape: bf16[128,128], index: 5, kind: input, shape index: {}]
  %s6 = inlined_call_operand.vmem [shape: f32[1,128], index: 6, kind: input, shape index: {}]
  %s7 = inlined_call_operand.hbm [shape: bf16[256,128], index: 7, kind: output, shape index: {}]
  %s8 = sld [smem:[#allocation0]]
  $region38: #{tpu_custom_call.1} parent=0
    _
  %s10 = ssub.s32 1, %s8
  %s11 = scalar_select 0, %s10, %s8
  $region1: #{tpu_custom_call.1} parent=0
    #allocation2 [shape = 'u8[65536]{0}', space=vmem, size = 0x10000, scoped, tag = 'output window, operand 0, single buffered']
    #allocation3 [shape = 's32[1]{0}', space=sflag, size = 0x4, scoped, tag = 'scoped memory for tpu_custom_call.1']
    %12 = vsyncpa [#allocation3], 0
    // Predicated region
    $region2: #{tpu_custom_call.1} parent=1 // pred_check
      _
    $region3: #{tpu_custom_call.1} parent=1 // pred_check_branch
      %14 = sbr.rel (0) target = $region5
    $region4: #{tpu_custom_call.1} parent=1 // pred_region
      _
    $region5: #{tpu_custom_call.1} parent=1 // pred_fallthru
      _
    // Predicated region
    $region6: #{tpu_custom_call.1} parent=1 // pred_check
      _
    $region7: #{tpu_custom_call.1} parent=1 // pred_check_branch
      %16 = sbr.rel (0) target = $region9
    $region8: #{tpu_custom_call.1} parent=1 // pred_region
      _
    $region9: #{tpu_custom_call.1} parent=1 // pred_fallthru
      _
    // Predicated region
    $region10: #{tpu_custom_call.1} parent=1 // pred_check
      _
    $region11: #{tpu_custom_call.1} parent=1 // pred_check_branch
      %18 = sbr.rel (0) target = $region13
    $region12: #{tpu_custom_call.1} parent=1 // pred_region
      _
    $region13: #{tpu_custom_call.1} parent=1 // pred_fallthru
      _
    // Predicated region
    $region14: #{tpu_custom_call.1} parent=1 // pred_check
      _
    $region15: #{tpu_custom_call.1} parent=1 // pred_check_branch
      %20 = sbr.rel (0) target = $region17
    $region16: #{tpu_custom_call.1} parent=1 // pred_region
      _
    $region17: #{tpu_custom_call.1} parent=1 // pred_fallthru
      _
    // Predicated region
    $region18: #{tpu_custom_call.1} parent=1 // pred_check
      _
    $region19: #{tpu_custom_call.1} parent=1 // pred_check_branch
      %22 = sbr.rel (0) target = $region21
    $region20: #{tpu_custom_call.1} parent=1 // pred_region
      _
    $region21: #{tpu_custom_call.1} parent=1 // pred_fallthru
      _
    // Predicated region
    $region22: #{tpu_custom_call.1} parent=1 // pred_check
      _
    $region23: #{tpu_custom_call.1} parent=1 // pred_check_branch
      %24 = sbr.rel (0) target = $region25
    $region24: #{tpu_custom_call.1} parent=1 // pred_region
      _
    $region25: #{tpu_custom_call.1} parent=1 // pred_fallthru
      _
    // Predicated region
    $region26: #{tpu_custom_call.1} parent=1 // pred_check
      _
    $region27: #{tpu_custom_call.1} parent=1 // pred_check_branch
      %26 = sbr.rel (0) target = $region29
    $region28: #{tpu_custom_call.1} parent=1 // pred_region
      _
    $region29: #{tpu_custom_call.1} parent=1 // pred_fallthru
      _
    %v27 = vld [vmem:[%s0] sm:$0xff]
    %v28 = vld [vmem:[%s0 + $0x8] sm:$0xff]
    %v29 = vld [vmem:[%s0 + $0x10] sm:$0xff]
    %v30 = vld [vmem:[%s0 + $0x18] sm:$0xff]
    %v31 = vld [vmem:[%s0 + $0x20] sm:$0xff]
    %v32 = vld [vmem:[%s0 + $0x28] sm:$0xff]
    %v33 = vld [vmem:[%s0 + $0x30] sm:$0xff]
    %v34 = vld [vmem:[%s0 + $0x38] sm:$0xff]
    %v35 = vld [vmem:[%s0 + $0x40] sm:$0xff]
    %v36 = vld [vmem:[%s0 + $0x48] sm:$0xff]
    %v37 = vld [vmem:[%s0 + $0x50] sm:$0xff]
    %v38 = vld [vmem:[%s0 + $0x58] sm:$0xff]
    %v39 = vld [vmem:[%s0 + $0x60] sm:$0xff]
    %v40 = vld [vmem:[%s0 + $0x68] sm:$0xff]
    %v41 = vld [vmem:[%s0 + $0x70] sm:$0xff]
    %v42 = vld [vmem:[%s0 + $0x78] sm:$0xff]
    %v43 = vld [vmem:[%s0 + $0x80] sm:$0xff]
    %v44 = vld [vmem:[%s0 + $0x88] sm:$0xff]
    %v45 = vld [vmem:[%s0 + $0x90] sm:$0xff]
    %v46 = vld [vmem:[%s0 + $0x98] sm:$0xff]
    %v47 = vld [vmem:[%s0 + $0xa0] sm:$0xff]
    %v48 = vld [vmem:[%s0 + $0xa8] sm:$0xff]
    %v49 = vld [vmem:[%s0 + $0xb0] sm:$0xff]
    %v50 = vld [vmem:[%s0 + $0xb8] sm:$0xff]
    %v51 = vld [vmem:[%s0 + $0xc0] sm:$0xff]
    %v52 = vld [vmem:[%s0 + $0xc8] sm:$0xff]
    %v53 = vld [vmem:[%s0 + $0xd0] sm:$0xff]
    %v54 = vld [vmem:[%s0 + $0xd8] sm:$0xff]
    %v55 = vld [vmem:[%s0 + $0xe0] sm:$0xff]
    %v56 = vld [vmem:[%s0 + $0xe8] sm:$0xff]
    %v57 = vld [vmem:[%s0 + $0xf0] sm:$0xff]
    %v58 = vld [vmem:[%s0 + $0xf8] sm:$0xff]
    %v59 = vld [vmem:[%s2] sm:$0x1]
    %v60 = vld [vmem:[%s1] sm:$0x1]
    %62 = vset.pattern.permute.xlu0 0
    %63 = vperm.xlu0 %62, %v27
    %v64 = vpop.permute.xlu0 %63
    %67 = vset.pattern.permute.xlu0 0
    %68 = vperm.xlu0 %67, %v28
    %v69 = vpop.permute.xlu0 %68
    %72 = vset.pattern.permute.xlu0 0
    %73 = vperm.xlu0 %72, %v29
    %v74 = vpop.permute.xlu0 %73
    %77 = vset.pattern.permute.xlu0 0
    %78 = vperm.xlu0 %77, %v30
    %v79 = vpop.permute.xlu0 %78
    %82 = vset.pattern.permute.xlu0 0
    %83 = vperm.xlu0 %82, %v31
    %v84 = vpop.permute.xlu0 %83
    %87 = vset.pattern.permute.xlu0 0
    %88 = vperm.xlu0 %87, %v32
    %v89 = vpop.permute.xlu0 %88
    %92 = vset.pattern.permute.xlu0 0
    %93 = vperm.xlu0 %92, %v33
    %v94 = vpop.permute.xlu0 %93
    %97 = vset.pattern.permute.xlu0 0
    %98 = vperm.xlu0 %97, %v34
    %v99 = vpop.permute.xlu0 %98
    %102 = vset.pattern.permute.xlu0 0
    %103 = vperm.xlu0 %102, %v35
    %v104 = vpop.permute.xlu0 %103
    %107 = vset.pattern.permute.xlu0 0
    %108 = vperm.xlu0 %107, %v36
    %v109 = vpop.permute.xlu0 %108
    %112 = vset.pattern.permute.xlu0 0
    %113 = vperm.xlu0 %112, %v37
    %v114 = vpop.permute.xlu0 %113
    %117 = vset.pattern.permute.xlu0 0
    %118 = vperm.xlu0 %117, %v38
    %v119 = vpop.permute.xlu0 %118
    %122 = vset.pattern.permute.xlu0 0
    %123 = vperm.xlu0 %122, %v39
    %v124 = vpop.permute.xlu0 %123
    %127 = vset.pattern.permute.xlu0 0
    %128 = vperm.xlu0 %127, %v40
    %v129 = vpop.permute.xlu0 %128
    %132 = vset.pattern.permute.xlu0 0
    %133 = vperm.xlu0 %132, %v41
    %v134 = vpop.permute.xlu0 %133
    %137 = vset.pattern.permute.xlu0 0
    %138 = vperm.xlu0 %137, %v42
    %v139 = vpop.permute.xlu0 %138
    %142 = vset.pattern.permute.xlu0 0
    %143 = vperm.xlu0 %142, %v43
    %v144 = vpop.permute.xlu0 %143
    %147 = vset.pattern.permute.xlu0 0
    %148 = vperm.xlu0 %147, %v44
    %v149 = vpop.permute.xlu0 %148
    %152 = vset.pattern.permute.xlu0 0
    %153 = vperm.xlu0 %152, %v45
    %v154 = vpop.permute.xlu0 %153
    %157 = vset.pattern.permute.xlu0 0
    %158 = vperm.xlu0 %157, %v46
    %v159 = vpop.permute.xlu0 %158
    %162 = vset.pattern.permute.xlu0 0
    %163 = vperm.xlu0 %162, %v47
    %v164 = vpop.permute.xlu0 %163
    %167 = vset.pattern.permute.xlu0 0
    %168 = vperm.xlu0 %167, %v48
    %v169 = vpop.permute.xlu0 %168
    %172 = vset.pattern.permute.xlu0 0
    %173 = vperm.xlu0 %172, %v49
    %v174 = vpop.permute.xlu0 %173
    %177 = vset.pattern.permute.xlu0 0
    %178 = vperm.xlu0 %177, %v50
    %v179 = vpop.permute.xlu0 %178
    %182 = vset.pattern.permute.xlu0 0
    %183 = vperm.xlu0 %182, %v51
    %v184 = vpop.permute.xlu0 %183
    %187 = vset.pattern.permute.xlu0 0
    %188 = vperm.xlu0 %187, %v52
    %v189 = vpop.permute.xlu0 %188
    %192 = vset.pattern.permute.xlu0 0
    %193 = vperm.xlu0 %192, %v53
    %v194 = vpop.permute.xlu0 %193
    %197 = vset.pattern.permute.xlu0 0
    %198 = vperm.xlu0 %197, %v54
    %v199 = vpop.permute.xlu0 %198
    %202 = vset.pattern.permute.xlu0 0
    %203 = vperm.xlu0 %202, %v55
    %v204 = vpop.permute.xlu0 %203
    %207 = vset.pattern.permute.xlu0 0
    %208 = vperm.xlu0 %207, %v56
    %v209 = vpop.permute.xlu0 %208
    %212 = vset.pattern.permute.xlu0 0
    %213 = vperm.xlu0 %212, %v57
    %v214 = vpop.permute.xlu0 %213
    %217 = vset.pattern.permute.xlu0 0
    %218 = vperm.xlu0 %217, %v58
    %v219 = vpop.permute.xlu0 %218
    %v221 = vperm.slane %v60, 0
    %v222 = vmul.f32 %v64, %v221
    %v223 = vmul.f32 %v69, %v221
    %v224 = vmul.f32 %v74, %v221
    %v225 = vmul.f32 %v79, %v221
    %v226 = vmul.f32 %v84, %v221
    %v227 = vmul.f32 %v89, %v221
    %v228 = vmul.f32 %v94, %v221
    %v229 = vmul.f32 %v99, %v221
    %v230 = vmul.f32 %v104, %v221
    %v231 = vmul.f32 %v109, %v221
    %v232 = vmul.f32 %v114, %v221
    %v233 = vmul.f32 %v119, %v221
    %v234 = vmul.f32 %v124, %v221
    %v235 = vmul.f32 %v129, %v221
    %v236 = vmul.f32 %v134, %v221
    %v237 = vmul.f32 %v139, %v221
    %v238 = vmul.f32 %v144, %v221
    %v239 = vmul.f32 %v149, %v221
    %v240 = vmul.f32 %v154, %v221
    %v241 = vmul.f32 %v159, %v221
    %v242 = vmul.f32 %v164, %v221
    %v243 = vmul.f32 %v169, %v221
    %v244 = vmul.f32 %v174, %v221
    %v245 = vmul.f32 %v179, %v221
    %v246 = vmul.f32 %v184, %v221
    %v247 = vmul.f32 %v189, %v221
    %v248 = vmul.f32 %v194, %v221
    %v249 = vmul.f32 %v199, %v221
    %v250 = vmul.f32 %v204, %v221
    %v251 = vmul.f32 %v209, %v221
    %v252 = vmul.f32 %v214, %v221
    %v253 = vmul.f32 %v219, %v221
    %v255 = vperm.slane %v59, 0
    %v257 = vadd.f32 %v255, %v222
    %v258 = vadd.f32 %v255, %v223
    %v259 = vadd.f32 %v255, %v224
    %v260 = vadd.f32 %v255, %v225
    %v261 = vadd.f32 %v255, %v226
    %v262 = vadd.f32 %v255, %v227
    %v263 = vadd.f32 %v255, %v228
    %v264 = vadd.f32 %v255, %v229
    %v265 = vadd.f32 %v255, %v230
    %v266 = vadd.f32 %v255, %v231
    %v267 = vadd.f32 %v255, %v232
    %v268 = vadd.f32 %v255, %v233
    %v269 = vadd.f32 %v255, %v234
    %v270 = vadd.f32 %v255, %v235
    %v271 = vadd.f32 %v255, %v236
    %v272 = vadd.f32 %v255, %v237
    %v273 = vadd.f32 %v255, %v238
    %v274 = vadd.f32 %v255, %v239
    %v275 = vadd.f32 %v255, %v240
    %v276 = vadd.f32 %v255, %v241
    %v277 = vadd.f32 %v255, %v242
    %v278 = vadd.f32 %v255, %v243
    %v279 = vadd.f32 %v255, %v244
    %v280 = vadd.f32 %v255, %v245
    %v281 = vadd.f32 %v255, %v246
    %v282 = vadd.f32 %v255, %v247
    %v283 = vadd.f32 %v255, %v248
    %v284 = vadd.f32 %v255, %v249
    %v285 = vadd.f32 %v255, %v250
    %v286 = vadd.f32 %v255, %v251
    %v287 = vadd.f32 %v255, %v252
    %v288 = vadd.f32 %v255, %v253
    %v289 = vld [vmem:[%s1 + $0x1] sm:$0x1]
    %290 = vset.pattern.permute.xlu0 1
    %291 = vperm.xlu0 %290, %v27
    %v292 = vpop.permute.xlu0 %291
    %294 = vset.pattern.permute.xlu0 1
    %295 = vperm.xlu0 %294, %v28
    %v296 = vpop.permute.xlu0 %295
    %298 = vset.pattern.permute.xlu0 1
    %299 = vperm.xlu0 %298, %v29
    %v300 = vpop.permute.xlu0 %299
    %302 = vset.pattern.permute.xlu0 1
    %303 = vperm.xlu0 %302, %v30
    %v304 = vpop.permute.xlu0 %303
    %306 = vset.pattern.permute.xlu0 1
    %307 = vperm.xlu0 %306, %v31
    %v308 = vpop.permute.xlu0 %307
    %310 = vset.pattern.permute.xlu0 1
    %311 = vperm.xlu0 %310, %v32
    %v312 = vpop.permute.xlu0 %311
    %314 = vset.pattern.permute.xlu0 1
    %315 = vperm.xlu0 %314, %v33
    %v316 = vpop.permute.xlu0 %315
    %318 = vset.pattern.permute.xlu0 1
    %319 = vperm.xlu0 %318, %v34
    %v320 = vpop.permute.xlu0 %319
    %322 = vset.pattern.permute.xlu0 1
    %323 = vperm.xlu0 %322, %v35
    %v324 = vpop.permute.xlu0 %323
    %326 = vset.pattern.permute.xlu0 1
    %327 = vperm.xlu0 %326, %v36
    %v328 = vpop.permute.xlu0 %327
    %330 = vset.pattern.permute.xlu0 1
    %331 = vperm.xlu0 %330, %v37
    %v332 = vpop.permute.xlu0 %331
    %334 = vset.pattern.permute.xlu0 1
    %335 = vperm.xlu0 %334, %v38
    %v336 = vpop.permute.xlu0 %335
    %338 = vset.pattern.permute.xlu0 1
    %339 = vperm.xlu0 %338, %v39
    %v340 = vpop.permute.xlu0 %339
    %342 = vset.pattern.permute.xlu0 1
    %343 = vperm.xlu0 %342, %v40
    %v344 = vpop.permute.xlu0 %343
    %346 = vset.pattern.permute.xlu0 1
    %347 = vperm.xlu0 %346, %v41
    %v348 = vpop.permute.xlu0 %347
    %350 = vset.pattern.permute.xlu0 1
    %351 = vperm.xlu0 %350, %v42
    %v352 = vpop.permute.xlu0 %351
    %354 = vset.pattern.permute.xlu0 1
    %355 = vperm.xlu0 %354, %v43
    %v356 = vpop.permute.xlu0 %355
    %358 = vset.pattern.permute.xlu0 1
    %359 = vperm.xlu0 %358, %v44
    %v360 = vpop.permute.xlu0 %359
    %362 = vset.pattern.permute.xlu0 1
    %363 = vperm.xlu0 %362, %v45
    %v364 = vpop.permute.xlu0 %363
    %366 = vset.pattern.permute.xlu0 1
    %367 = vperm.xlu0 %366, %v46
    %v368 = vpop.permute.xlu0 %367
    %370 = vset.pattern.permute.xlu0 1
    %371 = vperm.xlu0 %370, %v47
    %v372 = vpop.permute.xlu0 %371
    %374 = vset.pattern.permute.xlu0 1
    %375 = vperm.xlu0 %374, %v48
    %v376 = vpop.permute.xlu0 %375
    %378 = vset.pattern.permute.xlu0 1
    %379 = vperm.xlu0 %378, %v49
    %v380 = vpop.permute.xlu0 %379
    %382 = vset.pattern.permute.xlu0 1
    %383 = vperm.xlu0 %382, %v50
    %v384 = vpop.permute.xlu0 %383
    %386 = vset.pattern.permute.xlu0 1
    %387 = vperm.xlu0 %386, %v51
    %v388 = vpop.permute.xlu0 %387
    %390 = vset.pattern.permute.xlu0 1
    %391 = vperm.xlu0 %390, %v52
    %v392 = vpop.permute.xlu0 %391
    %394 = vset.pattern.permute.xlu0 1
    %395 = vperm.xlu0 %394, %v53
    %v396 = vpop.permute.xlu0 %395
    %398 = vset.pattern.permute.xlu0 1
    %399 = vperm.xlu0 %398, %v54
    %v400 = vpop.permute.xlu0 %399
    %402 = vset.pattern.permute.xlu0 1
    %403 = vperm.xlu0 %402, %v55
    %v404 = vpop.permute.xlu0 %403
    %406 = vset.pattern.permute.xlu0 1
    %407 = vperm.xlu0 %406, %v56
    %v408 = vpop.permute.xlu0 %407
    %410 = vset.pattern.permute.xlu0 1
    %411 = vperm.xlu0 %410, %v57
    %v412 = vpop.permute.xlu0 %411
    %414 = vset.pattern.permute.xlu0 1
    %415 = vperm.xlu0 %414, %v58
    %v416 = vpop.permute.xlu0 %415
    %v418 = vperm.slane %v289, 0
    %v419 = vmul.f32 %v292, %v418
    %v420 = vmul.f32 %v296, %v418
    %v421 = vmul.f32 %v300, %v418
    %v422 = vmul.f32 %v304, %v418
    %v423 = vmul.f32 %v308, %v418
    %v424 = vmul.f32 %v312, %v418
    %v425 = vmul.f32 %v316, %v418
    %v426 = vmul.f32 %v320, %v418
    %v427 = vmul.f32 %v324, %v418
    %v428 = vmul.f32 %v328, %v418
    %v429 = vmul.f32 %v332, %v418
    %v430 = vmul.f32 %v336, %v418
    %v431 = vmul.f32 %v340, %v418
    %v432 = vmul.f32 %v344, %v418
    %v433 = vmul.f32 %v348, %v418
    %v434 = vmul.f32 %v352, %v418
    %v435 = vmul.f32 %v356, %v418
    %v436 = vmul.f32 %v360, %v418
    %v437 = vmul.f32 %v364, %v418
    %v438 = vmul.f32 %v368, %v418
    %v439 = vmul.f32 %v372, %v418
    %v440 = vmul.f32 %v376, %v418
    %v441 = vmul.f32 %v380, %v418
    %v442 = vmul.f32 %v384, %v418
    %v443 = vmul.f32 %v388, %v418
    %v444 = vmul.f32 %v392, %v418
    %v445 = vmul.f32 %v396, %v418
    %v446 = vmul.f32 %v400, %v418
    %v447 = vmul.f32 %v404, %v418
    %v448 = vmul.f32 %v408, %v418
    %v449 = vmul.f32 %v412, %v418
    %v450 = vmul.f32 %v416, %v418
    %v451 = vadd.f32 %v257, %v419
    %v452 = vadd.f32 %v258, %v420
    %v453 = vadd.f32 %v259, %v421
    %v454 = vadd.f32 %v260, %v422
    %v455 = vadd.f32 %v261, %v423
    %v456 = vadd.f32 %v262, %v424
    %v457 = vadd.f32 %v263, %v425
    %v458 = vadd.f32 %v264, %v426
    %v459 = vadd.f32 %v265, %v427
    %v460 = vadd.f32 %v266, %v428
    %v461 = vadd.f32 %v267, %v429
    %v462 = vadd.f32 %v268, %v430
    %v463 = vadd.f32 %v269, %v431
    %v464 = vadd.f32 %v270, %v432
    %v465 = vadd.f32 %v271, %v433
    %v466 = vadd.f32 %v272, %v434
    %v467 = vadd.f32 %v273, %v435
    %v468 = vadd.f32 %v274, %v436
    %v469 = vadd.f32 %v275, %v437
    %v470 = vadd.f32 %v276, %v438
    %v471 = vadd.f32 %v277, %v439
    %v472 = vadd.f32 %v278, %v440
    %v473 = vadd.f32 %v279, %v441
    %v474 = vadd.f32 %v280, %v442
    %v475 = vadd.f32 %v281, %v443
    %v476 = vadd.f32 %v282, %v444
    %v477 = vadd.f32 %v283, %v445
    %v478 = vadd.f32 %v284, %v446
    %v479 = vadd.f32 %v285, %v447
    %v480 = vadd.f32 %v286, %v448
    %v481 = vadd.f32 %v287, %v449
    %v482 = vadd.f32 %v288, %v450
    %v483 = vld [vmem:[%s1 + $0x2] sm:$0x1]
    %484 = vset.pattern.permute.xlu0 2
    %485 = vperm.xlu0 %484, %v27
    %v486 = vpop.permute.xlu0 %485
    %488 = vset.pattern.permute.xlu0 2
    %489 = vperm.xlu0 %488, %v28
    %v490 = vpop.permute.xlu0 %489
    %492 = vset.pattern.permute.xlu0 2
    %493 = vperm.xlu0 %492, %v29
    %v494 = vpop.permute.xlu0 %493
    %496 = vset.pattern.permute.xlu0 2
    %497 = vperm.xlu0 %496, %v30
    %v498 = vpop.permute.xlu0 %497
    %500 = vset.pattern.permute.xlu0 2
    %501 = vperm.xlu0 %500, %v31
    %v502 = vpop.permute.xlu0 %501
    %504 = vset.pattern.permute.xlu0 2
    %505 = vperm.xlu0 %504, %v32
    %v506 = vpop.permute.xlu0 %505
    %508 = vset.pattern.permute.xlu0 2
    %509 = vperm.xlu0 %508, %v33
    %v510 = vpop.permute.xlu0 %509
    %512 = vset.pattern.permute.xlu0 2
    %513 = vperm.xlu0 %512, %v34
    %v514 = vpop.permute.xlu0 %513
    %516 = vset.pattern.permute.xlu0 2
    %517 = vperm.xlu0 %516, %v35
    %v518 = vpop.permute.xlu0 %517
    %520 = vset.pattern.permute.xlu0 2
    %521 = vperm.xlu0 %520, %v36
    %v522 = vpop.permute.xlu0 %521
    %524 = vset.pattern.permute.xlu0 2
    %525 = vperm.xlu0 %524, %v37
    %v526 = vpop.permute.xlu0 %525
    %528 = vset.pattern.permute.xlu0 2
    %529 = vperm.xlu0 %528, %v38
    %v530 = vpop.permute.xlu0 %529
    %532 = vset.pattern.permute.xlu0 2
    %533 = vperm.xlu0 %532, %v39
    %v534 = vpop.permute.xlu0 %533
    %536 = vset.pattern.permute.xlu0 2
    %537 = vperm.xlu0 %536, %v40
    %v538 = vpop.permute.xlu0 %537
    %540 = vset.pattern.permute.xlu0 2
    %541 = vperm.xlu0 %540, %v41
    %v542 = vpop.permute.xlu0 %541
    %544 = vset.pattern.permute.xlu0 2
    %545 = vperm.xlu0 %544, %v42
    %v546 = vpop.permute.xlu0 %545
    %548 = vset.pattern.permute.xlu0 2
    %549 = vperm.xlu0 %548, %v43
    %v550 = vpop.permute.xlu0 %549
    %552 = vset.pattern.permute.xlu0 2
    %553 = vperm.xlu0 %552, %v44
    %v554 = vpop.permute.xlu0 %553
    %556 = vset.pattern.permute.xlu0 2
    %557 = vperm.xlu0 %556, %v45
    %v558 = vpop.permute.xlu0 %557
    %560 = vset.pattern.permute.xlu0 2
    %561 = vperm.xlu0 %560, %v46
    %v562 = vpop.permute.xlu0 %561
    %564 = vset.pattern.permute.xlu0 2
    %565 = vperm.xlu0 %564, %v47
    %v566 = vpop.permute.xlu0 %565
    %568 = vset.pattern.permute.xlu0 2
    %569 = vperm.xlu0 %568, %v48
    %v570 = vpop.permute.xlu0 %569
    %572 = vset.pattern.permute.xlu0 2
    %573 = vperm.xlu0 %572, %v49
    %v574 = vpop.permute.xlu0 %573
    %576 = vset.pattern.permute.xlu0 2
    %577 = vperm.xlu0 %576, %v50
    %v578 = vpop.permute.xlu0 %577
    %580 = vset.pattern.permute.xlu0 2
    %581 = vperm.xlu0 %580, %v51
    %v582 = vpop.permute.xlu0 %581
    %584 = vset.pattern.permute.xlu0 2
    %585 = vperm.xlu0 %584, %v52
    %v586 = vpop.permute.xlu0 %585
    %588 = vset.pattern.permute.xlu0 2
    %589 = vperm.xlu0 %588, %v53
    %v590 = vpop.permute.xlu0 %589
    %592 = vset.pattern.permute.xlu0 2
    %593 = vperm.xlu0 %592, %v54
    %v594 = vpop.permute.xlu0 %593
    %596 = vset.pattern.permute.xlu0 2
    %597 = vperm.xlu0 %596, %v55
    %v598 = vpop.permute.xlu0 %597
    %600 = vset.pattern.permute.xlu0 2
    %601 = vperm.xlu0 %600, %v56
    %v602 = vpop.permute.xlu0 %601
    %604 = vset.pattern.permute.xlu0 2
    %605 = vperm.xlu0 %604, %v57
    %v606 = vpop.permute.xlu0 %605
    %608 = vset.pattern.permute.xlu0 2
    %609 = vperm.xlu0 %608, %v58
    %v610 = vpop.permute.xlu0 %609
    %v612 = vperm.slane %v483, 0
    %v613 = vmul.f32 %v486, %v612
    %v614 = vmul.f32 %v490, %v612
    %v615 = vmul.f32 %v494, %v612
    %v616 = vmul.f32 %v498, %v612
    %v617 = vmul.f32 %v502, %v612
    %v618 = vmul.f32 %v506, %v612
    %v619 = vmul.f32 %v510, %v612
    %v620 = vmul.f32 %v514, %v612
    %v621 = vmul.f32 %v518, %v612
    %v622 = vmul.f32 %v522, %v612
    %v623 = vmul.f32 %v526, %v612
    %v624 = vmul.f32 %v530, %v612
    %v625 = vmul.f32 %v534, %v612
    %v626 = vmul.f32 %v538, %v612
    %v627 = vmul.f32 %v542, %v612
    %v628 = vmul.f32 %v546, %v612
    %v629 = vmul.f32 %v550, %v612
    %v630 = vmul.f32 %v554, %v612
    %v631 = vmul.f32 %v558, %v612
    %v632 = vmul.f32 %v562, %v612
    %v633 = vmul.f32 %v566, %v612
    %v634 = vmul.f32 %v570, %v612
    %v635 = vmul.f32 %v574, %v612
    %v636 = vmul.f32 %v578, %v612
    %v637 = vmul.f32 %v582, %v612
    %v638 = vmul.f32 %v586, %v612
    %v639 = vmul.f32 %v590, %v612
    %v640 = vmul.f32 %v594, %v612
    %v641 = vmul.f32 %v598, %v612
    %v642 = vmul.f32 %v602, %v612
    %v643 = vmul.f32 %v606, %v612
    %v644 = vmul.f32 %v610, %v612
    %v645 = vadd.f32 %v451, %v613
    %v646 = vadd.f32 %v452, %v614
    %v647 = vadd.f32 %v453, %v615
    %v648 = vadd.f32 %v454, %v616
    %v649 = vadd.f32 %v455, %v617
    %v650 = vadd.f32 %v456, %v618
    %v651 = vadd.f32 %v457, %v619
    %v652 = vadd.f32 %v458, %v620
    %v653 = vadd.f32 %v459, %v621
    %v654 = vadd.f32 %v460, %v622
    %v655 = vadd.f32 %v461, %v623
    %v656 = vadd.f32 %v462, %v624
    %v657 = vadd.f32 %v463, %v625
    %v658 = vadd.f32 %v464, %v626
    %v659 = vadd.f32 %v465, %v627
    %v660 = vadd.f32 %v466, %v628
    %v661 = vadd.f32 %v467, %v629
    %v662 = vadd.f32 %v468, %v630
    %v663 = vadd.f32 %v469, %v631
    %v664 = vadd.f32 %v470, %v632
    %v665 = vadd.f32 %v471, %v633
    %v666 = vadd.f32 %v472, %v634
    %v667 = vadd.f32 %v473, %v635
    %v668 = vadd.f32 %v474, %v636
    %v669 = vadd.f32 %v475, %v637
    %v670 = vadd.f32 %v476, %v638
    %v671 = vadd.f32 %v477, %v639
    %v672 = vadd.f32 %v478, %v640
    %v673 = vadd.f32 %v479, %v641
    %v674 = vadd.f32 %v480, %v642
    %v675 = vadd.f32 %v481, %v643
    %v676 = vadd.f32 %v482, %v644
    %v677 = vld [vmem:[%s1 + $0x3] sm:$0x1]
    %678 = vset.pattern.permute.xlu0 3
    %679 = vperm.xlu0 %678, %v27
    %v680 = vpop.permute.xlu0 %679
    %682 = vset.pattern.permute.xlu0 3
    %683 = vperm.xlu0 %682, %v28
    %v684 = vpop.permute.xlu0 %683
    %686 = vset.pattern.permute.xlu0 3
    %687 = vperm.xlu0 %686, %v29
    %v688 = vpop.permute.xlu0 %687
    %690 = vset.pattern.permute.xlu0 3
    %691 = vperm.xlu0 %690, %v30
    %v692 = vpop.permute.xlu0 %691
    %694 = vset.pattern.permute.xlu0 3
    %695 = vperm.xlu0 %694, %v31
    %v696 = vpop.permute.xlu0 %695
    %698 = vset.pattern.permute.xlu0 3
    %699 = vperm.xlu0 %698, %v32
    %v700 = vpop.permute.xlu0 %699
    %702 = vset.pattern.permute.xlu0 3
    %703 = vperm.xlu0 %702, %v33
    %v704 = vpop.permute.xlu0 %703
    %706 = vset.pattern.permute.xlu0 3
    %707 = vperm.xlu0 %706, %v34
    %v708 = vpop.permute.xlu0 %707
    %710 = vset.pattern.permute.xlu0 3
    %711 = vperm.xlu0 %710, %v35
    %v712 = vpop.permute.xlu0 %711
    %714 = vset.pattern.permute.xlu0 3
    %715 = vperm.xlu0 %714, %v36
    %v716 = vpop.permute.xlu0 %715
    %718 = vset.pattern.permute.xlu0 3
    %719 = vperm.xlu0 %718, %v37
    %v720 = vpop.permute.xlu0 %719
    %722 = vset.pattern.permute.xlu0 3
    %723 = vperm.xlu0 %722, %v38
    %v724 = vpop.permute.xlu0 %723
    %726 = vset.pattern.permute.xlu0 3
    %727 = vperm.xlu0 %726, %v39
    %v728 = vpop.permute.xlu0 %727
    %730 = vset.pattern.permute.xlu0 3
    %731 = vperm.xlu0 %730, %v40
    %v732 = vpop.permute.xlu0 %731
    %734 = vset.pattern.permute.xlu0 3
    %735 = vperm.xlu0 %734, %v41
    %v736 = vpop.permute.xlu0 %735
    %738 = vset.pattern.permute.xlu0 3
    %739 = vperm.xlu0 %738, %v42
    %v740 = vpop.permute.xlu0 %739
    %742 = vset.pattern.permute.xlu0 3
    %743 = vperm.xlu0 %742, %v43
    %v744 = vpop.permute.xlu0 %743
    %746 = vset.pattern.permute.xlu0 3
    %747 = vperm.xlu0 %746, %v44
    %v748 = vpop.permute.xlu0 %747
    %750 = vset.pattern.permute.xlu0 3
    %751 = vperm.xlu0 %750, %v45
    %v752 = vpop.permute.xlu0 %751
    %754 = vset.pattern.permute.xlu0 3
    %755 = vperm.xlu0 %754, %v46
    %v756 = vpop.permute.xlu0 %755
    %758 = vset.pattern.permute.xlu0 3
    %759 = vperm.xlu0 %758, %v47
    %v760 = vpop.permute.xlu0 %759
    %762 = vset.pattern.permute.xlu0 3
    %763 = vperm.xlu0 %762, %v48
    %v764 = vpop.permute.xlu0 %763
    %766 = vset.pattern.permute.xlu0 3
    %767 = vperm.xlu0 %766, %v49
    %v768 = vpop.permute.xlu0 %767
    %770 = vset.pattern.permute.xlu0 3
    %771 = vperm.xlu0 %770, %v50
    %v772 = vpop.permute.xlu0 %771
    %774 = vset.pattern.permute.xlu0 3
    %775 = vperm.xlu0 %774, %v51
    %v776 = vpop.permute.xlu0 %775
    %778 = vset.pattern.permute.xlu0 3
    %779 = vperm.xlu0 %778, %v52
    %v780 = vpop.permute.xlu0 %779
    %782 = vset.pattern.permute.xlu0 3
    %783 = vperm.xlu0 %782, %v53
    %v784 = vpop.permute.xlu0 %783
    %786 = vset.pattern.permute.xlu0 3
    %787 = vperm.xlu0 %786, %v54
    %v788 = vpop.permute.xlu0 %787
    %790 = vset.pattern.permute.xlu0 3
    %791 = vperm.xlu0 %790, %v55
    %v792 = vpop.permute.xlu0 %791
    %794 = vset.pattern.permute.xlu0 3
    %795 = vperm.xlu0 %794, %v56
    %v796 = vpop.permute.xlu0 %795
    %798 = vset.pattern.permute.xlu0 3
    %799 = vperm.xlu0 %798, %v57
    %v800 = vpop.permute.xlu0 %799
    %802 = vset.pattern.permute.xlu0 3
    %803 = vperm.xlu0 %802, %v58
    %v804 = vpop.permute.xlu0 %803
    %v806 = vperm.slane %v677, 0
    %v807 = vmul.f32 %v680, %v806
    %v808 = vmul.f32 %v684, %v806
    %v809 = vmul.f32 %v688, %v806
    %v810 = vmul.f32 %v692, %v806
    %v811 = vmul.f32 %v696, %v806
    %v812 = vmul.f32 %v700, %v806
    %v813 = vmul.f32 %v704, %v806
    %v814 = vmul.f32 %v708, %v806
    %v815 = vmul.f32 %v712, %v806
    %v816 = vmul.f32 %v716, %v806
    %v817 = vmul.f32 %v720, %v806
    %v818 = vmul.f32 %v724, %v806
    %v819 = vmul.f32 %v728, %v806
    %v820 = vmul.f32 %v732, %v806
    %v821 = vmul.f32 %v736, %v806
    %v822 = vmul.f32 %v740, %v806
    %v823 = vmul.f32 %v744, %v806
    %v824 = vmul.f32 %v748, %v806
    %v825 = vmul.f32 %v752, %v806
    %v826 = vmul.f32 %v756, %v806
    %v827 = vmul.f32 %v760, %v806
    %v828 = vmul.f32 %v764, %v806
    %v829 = vmul.f32 %v768, %v806
    %v830 = vmul.f32 %v772, %v806
    %v831 = vmul.f32 %v776, %v806
    %v832 = vmul.f32 %v780, %v806
    %v833 = vmul.f32 %v784, %v806
    %v834 = vmul.f32 %v788, %v806
    %v835 = vmul.f32 %v792, %v806
    %v836 = vmul.f32 %v796, %v806
    %v837 = vmul.f32 %v800, %v806
    %v838 = vmul.f32 %v804, %v806
    %v839 = vadd.f32 %v645, %v807
    %v840 = vadd.f32 %v646, %v808
    %v841 = vadd.f32 %v647, %v809
    %v842 = vadd.f32 %v648, %v810
    %v843 = vadd.f32 %v649, %v811
    %v844 = vadd.f32 %v650, %v812
    %v845 = vadd.f32 %v651, %v813
    %v846 = vadd.f32 %v652, %v814
    %v847 = vadd.f32 %v653, %v815
    %v848 = vadd.f32 %v654, %v816
    %v849 = vadd.f32 %v655, %v817
    %v850 = vadd.f32 %v656, %v818
    %v851 = vadd.f32 %v657, %v819
    %v852 = vadd.f32 %v658, %v820
    %v853 = vadd.f32 %v659, %v821
    %v854 = vadd.f32 %v660, %v822
    %v855 = vadd.f32 %v661, %v823
    %v856 = vadd.f32 %v662, %v824
    %v857 = vadd.f32 %v663, %v825
    %v858 = vadd.f32 %v664, %v826
    %v859 = vadd.f32 %v665, %v827
    %v860 = vadd.f32 %v666, %v828
    %v861 = vadd.f32 %v667, %v829
    %v862 = vadd.f32 %v668, %v830
    %v863 = vadd.f32 %v669, %v831
    %v864 = vadd.f32 %v670, %v832
    %v865 = vadd.f32 %v671, %v833
    %v866 = vadd.f32 %v672, %v834
    %v867 = vadd.f32 %v673, %v835
    %v868 = vadd.f32 %v674, %v836
    %v869 = vadd.f32 %v675, %v837
    %v870 = vadd.f32 %v676, %v838
    %v871 = vmax.f32 %v839, 0.0
    %v872 = vmax.f32 %v840, 0.0
    %v873 = vmax.f32 %v841, 0.0
    %v874 = vmax.f32 %v842, 0.0
    %v875 = vmax.f32 %v843, 0.0
    %v876 = vmax.f32 %v844, 0.0
    %v877 = vmax.f32 %v845, 0.0
    %v878 = vmax.f32 %v846, 0.0
    %v879 = vmax.f32 %v847, 0.0
    %v880 = vmax.f32 %v848, 0.0
    %v881 = vmax.f32 %v849, 0.0
    %v882 = vmax.f32 %v850, 0.0
    %v883 = vmax.f32 %v851, 0.0
    %v884 = vmax.f32 %v852, 0.0
    %v885 = vmax.f32 %v853, 0.0
    %v886 = vmax.f32 %v854, 0.0
    %v887 = vmax.f32 %v855, 0.0
    %v888 = vmax.f32 %v856, 0.0
    %v889 = vmax.f32 %v857, 0.0
    %v890 = vmax.f32 %v858, 0.0
    %v891 = vmax.f32 %v859, 0.0
    %v892 = vmax.f32 %v860, 0.0
    %v893 = vmax.f32 %v861, 0.0
    %v894 = vmax.f32 %v862, 0.0
    %v895 = vmax.f32 %v863, 0.0
    %v896 = vmax.f32 %v864, 0.0
    %v897 = vmax.f32 %v865, 0.0
    %v898 = vmax.f32 %v866, 0.0
    %v899 = vmax.f32 %v867, 0.0
    %v900 = vmax.f32 %v868, 0.0
    %v901 = vmax.f32 %v869, 0.0
    %v902 = vmax.f32 %v870, 0.0
    %v903 = vpack.c.bf16 %v872, %v871
    %v904 = vpack.c.bf16 %v874, %v873
    %v905 = vpack.c.bf16 %v876, %v875
    %v906 = vpack.c.bf16 %v878, %v877
    %v907 = vpack.c.bf16 %v880, %v879
    %v908 = vpack.c.bf16 %v882, %v881
    %v909 = vpack.c.bf16 %v884, %v883
    %v910 = vpack.c.bf16 %v886, %v885
    %v911 = vpack.c.bf16 %v888, %v887
    %v912 = vpack.c.bf16 %v890, %v889
    %v913 = vpack.c.bf16 %v892, %v891
    %v914 = vpack.c.bf16 %v894, %v893
    %v915 = vpack.c.bf16 %v896, %v895
    %v916 = vpack.c.bf16 %v898, %v897
    %v917 = vpack.c.bf16 %v900, %v899
    %v918 = vpack.c.bf16 %v902, %v901
    %v919 = vld [vmem:[%s3] sm:$0xf]
    %v920 = vld [vmem:[%s3 + $0x4] sm:$0xf]
    %v921 = vld [vmem:[%s3 + $0x8] sm:$0xf]
    %v922 = vld [vmem:[%s3 + $0xc] sm:$0xf]
    %v923 = vld [vmem:[%s3 + $0x10] sm:$0xf]
    %v924 = vld [vmem:[%s3 + $0x14] sm:$0xf]
    %v925 = vld [vmem:[%s3 + $0x18] sm:$0xf]
    %v926 = vld [vmem:[%s3 + $0x1c] sm:$0xf]
    %v927 = vld [vmem:[%s3 + $0x20] sm:$0xf]
    %v928 = vld [vmem:[%s3 + $0x24] sm:$0xf]
    %v929 = vld [vmem:[%s3 + $0x28] sm:$0xf]
    %v930 = vld [vmem:[%s3 + $0x2c] sm:$0xf]
    %v931 = vld [vmem:[%s3 + $0x30] sm:$0xf]
    %v932 = vld [vmem:[%s3 + $0x34] sm:$0xf]
    %v933 = vld [vmem:[%s3 + $0x38] sm:$0xf]
    %v934 = vld [vmem:[%s3 + $0x3c] sm:$0xf]
    %v935 = vld [vmem:[%s4] sm:$0x1]
    %v937 = vperm.slane %v935, 0
    %v955 = vunpack.c.l.b16 %v919
    %v956 = vunpack.c.l.b16 %v920
    %v957 = vunpack.c.l.b16 %v921
    %v958 = vunpack.c.l.b16 %v922
    %v959 = vunpack.c.l.b16 %v923
    %v960 = vunpack.c.l.b16 %v924
    %v961 = vunpack.c.l.b16 %v925
    %v962 = vunpack.c.l.b16 %v926
    %v963 = vunpack.c.l.b16 %v927
    %v964 = vunpack.c.l.b16 %v928
    %v965 = vunpack.c.l.b16 %v929
    %v966 = vunpack.c.l.b16 %v930
    %v967 = vunpack.c.l.b16 %v931
    %v968 = vunpack.c.l.b16 %v932
    %v969 = vunpack.c.l.b16 %v933
    %v970 = vunpack.c.l.b16 %v934
    %v971 = vpack.c.b16 %v956, %v955
    %v972 = vpack.c.b16 %v958, %v957
    %v973 = vpack.c.b16 %v960, %v959
    %v974 = vpack.c.b16 %v962, %v961
    %v975 = vpack.c.b16 %v964, %v963
    %v976 = vpack.c.b16 %v966, %v965
    %v977 = vpack.c.b16 %v968, %v967
    %v978 = vpack.c.b16 %v970, %v969
    %987 = vmatpush.bf16.msra.mxu0 %v978
    %988 = vmatpush.bf16.msra.mxu0 %v977
    %989 = vmatpush.bf16.msra.mxu0 %v976
    %990 = vmatpush.bf16.msra.mxu0 %v975
    %991 = vmatpush.bf16.msra.mxu0 %v974
    %992 = vmatpush.bf16.msra.mxu0 %v973
    %993 = vmatpush.bf16.msra.mxu0 %v972
    %994 = vmatpush.bf16.msra.mxu0 %v971
    %995 = vmatmul.bf16.gmra.mxu0 %v903
    %v996 = vpop.f32.mrf.mxu0
    %v997 = vadd.f32 %v937, %v996
    %v998 = vpop.f32.mrf.mxu0
    %v999 = vadd.f32 %v937, %v998
    %1000 = vmatmul.bf16.gmra.mxu0 %v904
    %v1001 = vpop.f32.mrf.mxu0
    %v1002 = vadd.f32 %v937, %v1001
    %v1003 = vpop.f32.mrf.mxu0
    %v1004 = vadd.f32 %v937, %v1003
    %1005 = vmatmul.bf16.gmra.mxu0 %v905
    %v1006 = vpop.f32.mrf.mxu0
    %v1007 = vadd.f32 %v937, %v1006
    %v1008 = vpop.f32.mrf.mxu0
    %v1009 = vadd.f32 %v937, %v1008
    %1010 = vmatmul.bf16.gmra.mxu0 %v906
    %v1011 = vpop.f32.mrf.mxu0
    %v1012 = vadd.f32 %v937, %v1011
    %v1013 = vpop.f32.mrf.mxu0
    %v1014 = vadd.f32 %v937, %v1013
    %1015 = vmatmul.bf16.gmra.mxu0 %v907
    %v1016 = vpop.f32.mrf.mxu0
    %v1017 = vadd.f32 %v937, %v1016
    %v1018 = vpop.f32.mrf.mxu0
    %v1019 = vadd.f32 %v937, %v1018
    %1020 = vmatmul.bf16.gmra.mxu0 %v908
    %v1021 = vpop.f32.mrf.mxu0
    %v1022 = vadd.f32 %v937, %v1021
    %v1023 = vpop.f32.mrf.mxu0
    %v1024 = vadd.f32 %v937, %v1023
    %1025 = vmatmul.bf16.gmra.mxu0 %v909
    %v1026 = vpop.f32.mrf.mxu0
    %v1027 = vadd.f32 %v937, %v1026
    %v1028 = vpop.f32.mrf.mxu0
    %v1029 = vadd.f32 %v937, %v1028
    %1030 = vmatmul.bf16.gmra.mxu0 %v910
    %v1031 = vpop.f32.mrf.mxu0
    %v1032 = vadd.f32 %v937, %v1031
    %v1033 = vpop.f32.mrf.mxu0
    %v1034 = vadd.f32 %v937, %v1033
    %1035 = vmatmul.bf16.gmra.mxu0 %v911
    %v1036 = vpop.f32.mrf.mxu0
    %v1037 = vadd.f32 %v937, %v1036
    %v1038 = vpop.f32.mrf.mxu0
    %v1039 = vadd.f32 %v937, %v1038
    %1040 = vmatmul.bf16.gmra.mxu0 %v912
    %v1041 = vpop.f32.mrf.mxu0
    %v1042 = vadd.f32 %v937, %v1041
    %v1043 = vpop.f32.mrf.mxu0
    %v1044 = vadd.f32 %v937, %v1043
    %1045 = vmatmul.bf16.gmra.mxu0 %v913
    %v1046 = vpop.f32.mrf.mxu0
    %v1047 = vadd.f32 %v937, %v1046
    %v1048 = vpop.f32.mrf.mxu0
    %v1049 = vadd.f32 %v937, %v1048
    %1050 = vmatmul.bf16.gmra.mxu0 %v914
    %v1051 = vpop.f32.mrf.mxu0
    %v1052 = vadd.f32 %v937, %v1051
    %v1053 = vpop.f32.mrf.mxu0
    %v1054 = vadd.f32 %v937, %v1053
    %1055 = vmatmul.bf16.gmra.mxu0 %v915
    %v1056 = vpop.f32.mrf.mxu0
    %v1057 = vadd.f32 %v937, %v1056
    %v1058 = vpop.f32.mrf.mxu0
    %v1059 = vadd.f32 %v937, %v1058
    %1060 = vmatmul.bf16.gmra.mxu0 %v916
    %v1061 = vpop.f32.mrf.mxu0
    %v1062 = vadd.f32 %v937, %v1061
    %v1063 = vpop.f32.mrf.mxu0
    %v1064 = vadd.f32 %v937, %v1063
    %1065 = vmatmul.bf16.gmra.mxu0 %v917
    %v1066 = vpop.f32.mrf.mxu0
    %v1067 = vadd.f32 %v937, %v1066
    %v1068 = vpop.f32.mrf.mxu0
    %v1069 = vadd.f32 %v937, %v1068
    %1070 = vmatmul.bf16.gmra.mxu0 %v918
    %v1071 = vpop.f32.mrf.mxu0
    %v1072 = vadd.f32 %v937, %v1071
    %v1073 = vpop.f32.mrf.mxu0
    %v1074 = vadd.f32 %v937, %v1073
    %1075 = vdwg.mxu0
    %v1076 = vmax.f32 %v997, 0.0
    %v1077 = vmax.f32 %v999, 0.0
    %v1078 = vmax.f32 %v1002, 0.0
    %v1079 = vmax.f32 %v1004, 0.0
    %v1080 = vmax.f32 %v1007, 0.0
    %v1081 = vmax.f32 %v1009, 0.0
    %v1082 = vmax.f32 %v1012, 0.0
    %v1083 = vmax.f32 %v1014, 0.0
    %v1084 = vmax.f32 %v1017, 0.0
    %v1085 = vmax.f32 %v1019, 0.0
    %v1086 = vmax.f32 %v1022, 0.0
    %v1087 = vmax.f32 %v1024, 0.0
    %v1088 = vmax.f32 %v1027, 0.0
    %v1089 = vmax.f32 %v1029, 0.0
    %v1090 = vmax.f32 %v1032, 0.0
    %v1091 = vmax.f32 %v1034, 0.0
    %v1092 = vmax.f32 %v1037, 0.0
    %v1093 = vmax.f32 %v1039, 0.0
    %v1094 = vmax.f32 %v1042, 0.0
    %v1095 = vmax.f32 %v1044, 0.0
    %v1096 = vmax.f32 %v1047, 0.0
    %v1097 = vmax.f32 %v1049, 0.0
    %v1098 = vmax.f32 %v1052, 0.0
    %v1099 = vmax.f32 %v1054, 0.0
    %v1100 = vmax.f32 %v1057, 0.0
    %v1101 = vmax.f32 %v1059, 0.0
    %v1102 = vmax.f32 %v1062, 0.0
    %v1103 = vmax.f32 %v1064, 0.0
    %v1104 = vmax.f32 %v1067, 0.0
    %v1105 = vmax.f32 %v1069, 0.0
    %v1106 = vmax.f32 %v1072, 0.0
    %v1107 = vmax.f32 %v1074, 0.0
    %v1108 = vpack.c.bf16 %v1077, %v1076
    %v1109 = vpack.c.bf16 %v1079, %v1078
    %v1110 = vpack.c.bf16 %v1081, %v1080
    %v1111 = vpack.c.bf16 %v1083, %v1082
    %v1112 = vpack.c.bf16 %v1085, %v1084
    %v1113 = vpack.c.bf16 %v1087, %v1086
    %v1114 = vpack.c.bf16 %v1089, %v1088
    %v1115 = vpack.c.bf16 %v1091, %v1090
    %v1116 = vpack.c.bf16 %v1093, %v1092
    %v1117 = vpack.c.bf16 %v1095, %v1094
    %v1118 = vpack.c.bf16 %v1097, %v1096
    %v1119 = vpack.c.bf16 %v1099, %v1098
    %v1120 = vpack.c.bf16 %v1101, %v1100
    %v1121 = vpack.c.bf16 %v1103, %v1102
    %v1122 = vpack.c.bf16 %v1105, %v1104
    %v1123 = vpack.c.bf16 %v1107, %v1106
    %v1124 = vld [vmem:[%s5] sm:$0xf]
    %v1125 = vld [vmem:[%s5 + $0x4] sm:$0xf]
    %v1126 = vld [vmem:[%s5 + $0x8] sm:$0xf]
    %v1127 = vld [vmem:[%s5 + $0xc] sm:$0xf]
    %v1128 = vld [vmem:[%s5 + $0x10] sm:$0xf]
    %v1129 = vld [vmem:[%s5 + $0x14] sm:$0xf]
    %v1130 = vld [vmem:[%s5 + $0x18] sm:$0xf]
    %v1131 = vld [vmem:[%s5 + $0x1c] sm:$0xf]
    %v1132 = vld [vmem:[%s5 + $0x20] sm:$0xf]
    %v1133 = vld [vmem:[%s5 + $0x24] sm:$0xf]
    %v1134 = vld [vmem:[%s5 + $0x28] sm:$0xf]
    %v1135 = vld [vmem:[%s5 + $0x2c] sm:$0xf]
    %v1136 = vld [vmem:[%s5 + $0x30] sm:$0xf]
    %v1137 = vld [vmem:[%s5 + $0x34] sm:$0xf]
    %v1138 = vld [vmem:[%s5 + $0x38] sm:$0xf]
    %v1139 = vld [vmem:[%s5 + $0x3c] sm:$0xf]
    %v1140 = vld [vmem:[%s6] sm:$0x1]
    %v1142 = vperm.slane %v1140, 0
    %v1160 = vunpack.c.l.b16 %v1124
    %v1161 = vunpack.c.l.b16 %v1125
    %v1162 = vunpack.c.l.b16 %v1126
    %v1163 = vunpack.c.l.b16 %v1127
    %v1164 = vunpack.c.l.b16 %v1128
    %v1165 = vunpack.c.l.b16 %v1129
    %v1166 = vunpack.c.l.b16 %v1130
    %v1167 = vunpack.c.l.b16 %v1131
    %v1168 = vunpack.c.l.b16 %v1132
    %v1169 = vunpack.c.l.b16 %v1133
    %v1170 = vunpack.c.l.b16 %v1134
    %v1171 = vunpack.c.l.b16 %v1135
    %v1172 = vunpack.c.l.b16 %v1136
    %v1173 = vunpack.c.l.b16 %v1137
    %v1174 = vunpack.c.l.b16 %v1138
    %v1175 = vunpack.c.l.b16 %v1139
    %v1176 = vpack.c.b16 %v1161, %v1160
    %v1177 = vpack.c.b16 %v1163, %v1162
    %v1178 = vpack.c.b16 %v1165, %v1164
    %v1179 = vpack.c.b16 %v1167, %v1166
    %v1180 = vpack.c.b16 %v1169, %v1168
    %v1181 = vpack.c.b16 %v1171, %v1170
    %v1182 = vpack.c.b16 %v1173, %v1172
    %v1183 = vpack.c.b16 %v1175, %v1174
    %1192 = vmatpush.bf16.msra.mxu0 %v1183
    %1193 = vmatpush.bf16.msra.mxu0 %v1182
    %1194 = vmatpush.bf16.msra.mxu0 %v1181
    %1195 = vmatpush.bf16.msra.mxu0 %v1180
    %1196 = vmatpush.bf16.msra.mxu0 %v1179
    %1197 = vmatpush.bf16.msra.mxu0 %v1178
    %1198 = vmatpush.bf16.msra.mxu0 %v1177
    %1199 = vmatpush.bf16.msra.mxu0 %v1176
    %1200 = vmatmul.bf16.gmra.mxu0 %v1108
    %v1201 = vpop.f32.mrf.mxu0
    %v1202 = vadd.f32 %v1142, %v1201
    %v1203 = vpop.f32.mrf.mxu0
    %v1204 = vadd.f32 %v1142, %v1203
    %1205 = vmatmul.bf16.gmra.mxu0 %v1109
    %v1206 = vpop.f32.mrf.mxu0
    %v1207 = vadd.f32 %v1142, %v1206
    %v1208 = vpop.f32.mrf.mxu0
    %v1209 = vadd.f32 %v1142, %v1208
    %1210 = vmatmul.bf16.gmra.mxu0 %v1110
    %v1211 = vpop.f32.mrf.mxu0
    %v1212 = vadd.f32 %v1142, %v1211
    %v1213 = vpop.f32.mrf.mxu0
    %v1214 = vadd.f32 %v1142, %v1213
    %1215 = vmatmul.bf16.gmra.mxu0 %v1111
    %v1216 = vpop.f32.mrf.mxu0
    %v1217 = vadd.f32 %v1142, %v1216
    %v1218 = vpop.f32.mrf.mxu0
    %v1219 = vadd.f32 %v1142, %v1218
    %1220 = vmatmul.bf16.gmra.mxu0 %v1112
    %v1221 = vpop.f32.mrf.mxu0
    %v1222 = vadd.f32 %v1142, %v1221
    %v1223 = vpop.f32.mrf.mxu0
    %v1224 = vadd.f32 %v1142, %v1223
    %1225 = vmatmul.bf16.gmra.mxu0 %v1113
    %v1226 = vpop.f32.mrf.mxu0
    %v1227 = vadd.f32 %v1142, %v1226
    %v1228 = vpop.f32.mrf.mxu0
    %v1229 = vadd.f32 %v1142, %v1228
    %1230 = vmatmul.bf16.gmra.mxu0 %v1114
    %v1231 = vpop.f32.mrf.mxu0
    %v1232 = vadd.f32 %v1142, %v1231
    %v1233 = vpop.f32.mrf.mxu0
    %v1234 = vadd.f32 %v1142, %v1233
    %1235 = vmatmul.bf16.gmra.mxu0 %v1115
    %v1236 = vpop.f32.mrf.mxu0
    %v1237 = vadd.f32 %v1142, %v1236
    %v1238 = vpop.f32.mrf.mxu0
    %v1239 = vadd.f32 %v1142, %v1238
    %1240 = vmatmul.bf16.gmra.mxu0 %v1116
    %v1241 = vpop.f32.mrf.mxu0
    %v1242 = vadd.f32 %v1142, %v1241
    %v1243 = vpop.f32.mrf.mxu0
    %v1244 = vadd.f32 %v1142, %v1243
    %1245 = vmatmul.bf16.gmra.mxu0 %v1117
    %v1246 = vpop.f32.mrf.mxu0
    %v1247 = vadd.f32 %v1142, %v1246
    %v1248 = vpop.f32.mrf.mxu0
    %v1249 = vadd.f32 %v1142, %v1248
    %1250 = vmatmul.bf16.gmra.mxu0 %v1118
    %v1251 = vpop.f32.mrf.mxu0
    %v1252 = vadd.f32 %v1142, %v1251
    %v1253 = vpop.f32.mrf.mxu0
    %v1254 = vadd.f32 %v1142, %v1253
    %1255 = vmatmul.bf16.gmra.mxu0 %v1119
    %v1256 = vpop.f32.mrf.mxu0
    %v1257 = vadd.f32 %v1142, %v1256
    %v1258 = vpop.f32.mrf.mxu0
    %v1259 = vadd.f32 %v1142, %v1258
    %1260 = vmatmul.bf16.gmra.mxu0 %v1120
    %v1261 = vpop.f32.mrf.mxu0
    %v1262 = vadd.f32 %v1142, %v1261
    %v1263 = vpop.f32.mrf.mxu0
    %v1264 = vadd.f32 %v1142, %v1263
    %1265 = vmatmul.bf16.gmra.mxu0 %v1121
    %v1266 = vpop.f32.mrf.mxu0
    %v1267 = vadd.f32 %v1142, %v1266
    %v1268 = vpop.f32.mrf.mxu0
    %v1269 = vadd.f32 %v1142, %v1268
    %1270 = vmatmul.bf16.gmra.mxu0 %v1122
    %v1271 = vpop.f32.mrf.mxu0
    %v1272 = vadd.f32 %v1142, %v1271
    %v1273 = vpop.f32.mrf.mxu0
    %v1274 = vadd.f32 %v1142, %v1273
    %1275 = vmatmul.bf16.gmra.mxu0 %v1123
    %v1276 = vpop.f32.mrf.mxu0
    %v1277 = vadd.f32 %v1142, %v1276
    %v1278 = vpop.f32.mrf.mxu0
    %v1279 = vadd.f32 %v1142, %v1278
    %1280 = vdwg.mxu0
    %v1281 = vpack.c.bf16 %v1202, %v1202
    %v1282 = vpack.c.bf16 %v1204, %v1204
    %v1283 = vpack.c.bf16 %v1207, %v1207
    %v1284 = vpack.c.bf16 %v1209, %v1209
    %v1285 = vpack.c.bf16 %v1212, %v1212
    %v1286 = vpack.c.bf16 %v1214, %v1214
    %v1287 = vpack.c.bf16 %v1217, %v1217
    %v1288 = vpack.c.bf16 %v1219, %v1219
    %v1289 = vpack.c.bf16 %v1222, %v1222
    %v1290 = vpack.c.bf16 %v1224, %v1224
    %v1291 = vpack.c.bf16 %v1227, %v1227
    %v1292 = vpack.c.bf16 %v1229, %v1229
    %v1293 = vpack.c.bf16 %v1232, %v1232
    %v1294 = vpack.c.bf16 %v1234, %v1234
    %v1295 = vpack.c.bf16 %v1237, %v1237
    %v1296 = vpack.c.bf16 %v1239, %v1239
    %v1297 = vpack.c.bf16 %v1242, %v1242
    %v1298 = vpack.c.bf16 %v1244, %v1244
    %v1299 = vpack.c.bf16 %v1247, %v1247
    %v1300 = vpack.c.bf16 %v1249, %v1249
    %v1301 = vpack.c.bf16 %v1252, %v1252
    %v1302 = vpack.c.bf16 %v1254, %v1254
    %v1303 = vpack.c.bf16 %v1257, %v1257
    %v1304 = vpack.c.bf16 %v1259, %v1259
    %v1305 = vpack.c.bf16 %v1262, %v1262
    %v1306 = vpack.c.bf16 %v1264, %v1264
    %v1307 = vpack.c.bf16 %v1267, %v1267
    %v1308 = vpack.c.bf16 %v1269, %v1269
    %v1309 = vpack.c.bf16 %v1272, %v1272
    %v1310 = vpack.c.bf16 %v1274, %v1274
    %v1311 = vpack.c.bf16 %v1277, %v1277
    %v1312 = vpack.c.bf16 %v1279, %v1279
    %1313 = vst [vmem:[#allocation2] sm:$0xf] %v1281
    %1314 = vst [vmem:[#allocation2 + $0x4] sm:$0xf] %v1282
    %1315 = vst [vmem:[#allocation2 + $0x8] sm:$0xf] %v1283
    %1316 = vst [vmem:[#allocation2 + $0xc] sm:$0xf] %v1284
    %1317 = vst [vmem:[#allocation2 + $0x10] sm:$0xf] %v1285
    %1318 = vst [vmem:[#allocation2 + $0x14] sm:$0xf] %v1286
    %1319 = vst [vmem:[#allocation2 + $0x18] sm:$0xf] %v1287
    %1320 = vst [vmem:[#allocation2 + $0x1c] sm:$0xf] %v1288
    %1321 = vst [vmem:[#allocation2 + $0x20] sm:$0xf] %v1289
    %1322 = vst [vmem:[#allocation2 + $0x24] sm:$0xf] %v1290
    %1323 = vst [vmem:[#allocation2 + $0x28] sm:$0xf] %v1291
    %1324 = vst [vmem:[#allocation2 + $0x2c] sm:$0xf] %v1292
    %1325 = vst [vmem:[#allocation2 + $0x30] sm:$0xf] %v1293
    %1326 = vst [vmem:[#allocation2 + $0x34] sm:$0xf] %v1294
    %1327 = vst [vmem:[#allocation2 + $0x38] sm:$0xf] %v1295
    %1328 = vst [vmem:[#allocation2 + $0x3c] sm:$0xf] %v1296
    %1329 = vst [vmem:[#allocation2 + $0x40] sm:$0xf] %v1297
    %1330 = vst [vmem:[#allocation2 + $0x44] sm:$0xf] %v1298
    %1331 = vst [vmem:[#allocation2 + $0x48] sm:$0xf] %v1299
    %1332 = vst [vmem:[#allocation2 + $0x4c] sm:$0xf] %v1300
    %1333 = vst [vmem:[#allocation2 + $0x50] sm:$0xf] %v1301
    %1334 = vst [vmem:[#allocation2 + $0x54] sm:$0xf] %v1302
    %1335 = vst [vmem:[#allocation2 + $0x58] sm:$0xf] %v1303
    %1336 = vst [vmem:[#allocation2 + $0x5c] sm:$0xf] %v1304
    %1337 = vst [vmem:[#allocation2 + $0x60] sm:$0xf] %v1305
    %1338 = vst [vmem:[#allocation2 + $0x64] sm:$0xf] %v1306
    %1339 = vst [vmem:[#allocation2 + $0x68] sm:$0xf] %v1307
    %1340 = vst [vmem:[#allocation2 + $0x6c] sm:$0xf] %v1308
    %1341 = vst [vmem:[#allocation2 + $0x70] sm:$0xf] %v1309
    %1342 = vst [vmem:[#allocation2 + $0x74] sm:$0xf] %v1310
    %1343 = vst [vmem:[#allocation2 + $0x78] sm:$0xf] %v1311
    %1344 = vst [vmem:[#allocation2 + $0x7c] sm:$0xf] %v1312
    // Predicated region
    $region30: #{tpu_custom_call.1} parent=1 // pred_check
      _
    $region31: #{tpu_custom_call.1} parent=1 // pred_check_branch
      %1346 = sbr.rel (0) target = $region33
    $region32: #{tpu_custom_call.1} parent=1 // pred_region
      %1348 = vsyncadd [#allocation3], 0
      %s1349 = sshll.u32 [#allocation2], 4
      %s1350 = int_to_ptr.vmem [resolvable:$true] %s1349
      %s1351 = sshll.u32 %s7, 4
      %s1352 = int_to_ptr.hbm [resolvable:$true] %s1351
      %1357 = dma.vmem_to_hbm [thread:$0]  %s1350, 2048, %s1352, [#allocation3], 64, 64, 4
    $region33: #{tpu_custom_call.1} parent=1 // pred_fallthru
      _
    // Predicated region
    $region34: #{tpu_custom_call.1} parent=1 // pred_check
      _
    $region35: #{tpu_custom_call.1} parent=1 // pred_check_branch
      %1359 = sbr.rel (0) target = $region37
    $region36: #{tpu_custom_call.1} parent=1 // pred_region
      %1361 = dma.done [#allocation3], 2048
    $region37: #{tpu_custom_call.1} parent=1 // pred_fallthru
      _
    %1362 = vsyncpa [#allocation3], 1

</llo_original>
